<compile_context>
chip_gen: v7x
topology: tpu7x:2x2x1
jax: 0.10.0
libtpu: 0.0.40
codegen_flags: <defaults>
</compile_context>

<pallas_src>
import functools
import math

import jax
import jax.numpy as jnp
from jax.experimental import pallas as pl
from jax.experimental.pallas import tpu as pltpu


def _attention_kernel(x_ref, wq_ref, bq_ref, wk_ref, bk_ref, wv_ref, bv_ref,
                      out_ref, attn_ref, k_scr, v_scr, *,
                      inv_scale, tq, compute_dtype, approx_recip):
    qi = pl.program_id(1)

    # Once per batch element (q-tile 0): project K and V for the whole
    # sequence into VMEM scratch; reused by every q tile of this batch item.
    # NOTE: correctness relies on all qi iterations of a given b running in
    # order on the same core after this init -> the q axis must stay
    # "arbitrary" (sequential) in dimension_semantics.
    @pl.when(qi == 0)
    def _():
        x = x_ref[...].astype(compute_dtype)                    # (S, D)
        k = jnp.dot(x, wk_ref[...].astype(compute_dtype),
                    preferred_element_type=jnp.float32) + bk_ref[...]
        v = jnp.dot(x, wv_ref[...].astype(compute_dtype),
                    preferred_element_type=jnp.float32) + bv_ref[...]
        k_scr[...] = k.astype(k_scr.dtype)
        v_scr[...] = v.astype(v_scr.dtype)

    # Per-tile Q projection: only the tq rows of x this tile needs.
    row = pl.multiple_of(qi * tq, tq)
    x_tile = x_ref[pl.ds(row, tq), :].astype(compute_dtype)     # (tq, D)
    q = ((jnp.dot(x_tile, wq_ref[...].astype(compute_dtype),
                  preferred_element_type=jnp.float32) + bq_ref[...])
         * inv_scale).astype(compute_dtype)                     # (tq, D)

    # scores = Q K^T : contract the D axis of both operands directly so no
    # explicit transpose / extra VMEM copy of K is materialized.
    scores = jax.lax.dot_general(
        q, k_scr[...],
        dimension_numbers=(((1,), (1,)), ((), ())),
        preferred_element_type=jnp.float32)                     # (tq, S) f32

    # Numerically stable softmax: max / sum / reciprocal in f32, exp and the
    # e * recip multiply in the compute dtype (bf16 EUP on v6e/v7x).
    m = jnp.max(scores, axis=-1, keepdims=True)
    e = jnp.exp((scores - m).astype(compute_dtype))             # (tq, S)
    denom = jnp.sum(e.astype(jnp.float32), axis=-1, keepdims=True)
    recip = pl.reciprocal(denom, approx=approx_recip)           # (tq, 1) f32
    w_attn = e * recip.astype(e.dtype)                          # (tq, S)

    out = jnp.dot(w_attn.astype(compute_dtype), v_scr[...],
                  preferred_element_type=jnp.float32)           # (tq, D) f32

    out_ref[...] = out.astype(out_ref.dtype)
    attn_ref[...] = w_attn.astype(attn_ref.dtype)


def _pick_q_tile(seq_len, max_q_tile=128):
    for cand in (256, 128, 64, 32, 16, 8):
        if cand <= max_q_tile and cand <= seq_len and seq_len % cand == 0:
            return cand
    # TODO(synk): add a padding / ragged-tile path for large sequence lengths
    # not divisible by the candidates instead of a whole-sequence tile.
    return seq_len


def attention_block(x, wq, bq, wk, bk, wv, bv, *,
                    compute_dtype=jnp.bfloat16, attn_dtype=None,
                    max_q_tile=128):
    """x: (B, S, D). w*: (D, D) already transposed to (in, out). b*: (1, D).

    Returns (output, attention_weights) like the PyTorch module.  output keeps
    x.dtype; attention_weights are stored in `attn_dtype` (default:
    compute_dtype) so the dominant (B, S, S) HBM writeback can be bf16.
    """
    B, S, D = x.shape
    out_dtype = jnp.dtype(x.dtype)
    cdt = jnp.dtype(compute_dtype)
    adt = cdt if attn_dtype is None else jnp.dtype(attn_dtype)
    inv_scale = 1.0 / math.sqrt(float(D))
    tq = _pick_q_tile(S, max_q_tile)
    n_q = S // tq
    approx_recip = bool(cdt != jnp.dtype(jnp.float32))

    # Cast the streaming operands to the compute dtype in the wrapper: halves
    # the HBM read + double-buffered VMEM footprint of the x block on the bf16
    # path and removes per-step casts of the (constant-index) weight blocks.
    x_k = x.astype(cdt)
    wq_k, wk_k, wv_k = (w.astype(cdt) for w in (wq, wk, wv))
    bq_k, bk_k, bv_k = (b.astype(jnp.float32) for b in (bq, bk, bv))

    # VMEM footprint: double-buffered pipeline blocks + persistent K/V scratch
    # + headroom for the compiler-staged f32 (tq, S) intermediates.
    x_item = cdt.itemsize
    est = (2 * S * D * x_item                                  # x block
           + 2 * 3 * (D * D * x_item + D * 4)                  # weights + biases
           + 2 * (tq * D * out_dtype.itemsize + tq * S * adt.itemsize)  # outs
           + 2 * S * D * cdt.itemsize                          # K / V scratch
           + 4 * tq * S * 4)                                   # f32 staging headroom
    try:
        vmem_cap = pltpu.get_tpu_info().vmem_capacity_bytes    # 64 MiB on v7x
    except Exception:
        vmem_cap = 64 * 1024 * 1024                            # conservative
    vmem_limit = int(min(0.8 * vmem_cap,
                         max(32 * 1024 * 1024, 2 * est)))

    cost = pl.CostEstimate(
        flops=int(6 * B * S * D * D + 4 * B * S * S * D),
        transcendentals=int(B * S * S),
        bytes_accessed=int(B * S * D * (x_item + out_dtype.itemsize)
                           + B * S * S * adt.itemsize
                           + 3 * (D * D * x_item + D * 4)),
    )

    kernel = functools.partial(
        _attention_kernel, inv_scale=inv_scale, tq=tq,
        compute_dtype=cdt, approx_recip=approx_recip)

    out, attn = pl.pallas_call(
        kernel,
        out_shape=(
            jax.ShapeDtypeStruct((B, S, D), out_dtype),
            jax.ShapeDtypeStruct((B, S, S), adt),
        ),
        grid_spec=pltpu.PrefetchScalarGridSpec(
            num_scalar_prefetch=0,
            grid=(B, n_q),
            in_specs=[
                # whole-sequence x (re-fetched only when the batch index moves)
                pl.BlockSpec((None, S, D), lambda b, qi: (b, 0, 0)),
                pl.BlockSpec((D, D), lambda b, qi: (0, 0)),    # Wq
                pl.BlockSpec((1, D), lambda b, qi: (0, 0)),    # bq
                pl.BlockSpec((D, D), lambda b, qi: (0, 0)),    # Wk
                pl.BlockSpec((1, D), lambda b, qi: (0, 0)),    # bk
                pl.BlockSpec((D, D), lambda b, qi: (0, 0)),    # Wv
                pl.BlockSpec((1, D), lambda b, qi: (0, 0)),    # bv
            ],
            out_specs=[
                pl.BlockSpec((None, tq, D), lambda b, qi: (b, qi, 0)),
                pl.BlockSpec((None, tq, S), lambda b, qi: (b, qi, 0)),
            ],
            scratch_shapes=[
                pltpu.VMEM((S, D), cdt),   # K
                pltpu.VMEM((S, D), cdt),   # V
            ],
        ),
        compiler_params=pltpu.CompilerParams(
            # batch axis parallel (megacore); q-tile axis MUST stay sequential
            # because the K/V scratch is filled at qi == 0 and reused later.
            dimension_semantics=("parallel", "arbitrary"),
            vmem_limit_bytes=vmem_limit),
        cost_estimate=cost,
    )(x_k, wq_k, bq_k, wk_k, bk_k, wv_k, bv_k)
    return out, attn


def _reference(x, wq, bq, wk, bk, wv, bv):
    q = x @ wq + bq
    k = x @ wk + bk
    v = x @ wv + bv
    scores = jnp.einsum("bqd,bkd->bqk", q, k) / math.sqrt(x.shape[-1])
    w = jax.nn.softmax(scores, axis=-1)
    return jnp.einsum("bqk,bkd->bqd", w, v), w


def _make_inputs(key, B, S, D):
    kx, kq, kbq, kk, kbk, kv, kbv = jax.random.split(key, 7)
    bound = 1.0 / math.sqrt(D)   # PyTorch Linear-like uniform init range
    x = jax.random.normal(kx, (B, S, D), dtype=jnp.float32)
    wq = jax.random.uniform(kq, (D, D), jnp.float32, -bound, bound)
    bq = jax.random.uniform(kbq, (1, D), jnp.float32, -bound, bound)
    wk = jax.random.uniform(kk, (D, D), jnp.float32, -bound, bound)
    bk = jax.random.uniform(kbk, (1, D), jnp.float32, -bound, bound)
    wv = jax.random.uniform(kv, (D, D), jnp.float32, -bound, bound)
    bv = jax.random.uniform(kbv, (1, D), jnp.float32, -bound, bound)
    return x, wq, bq, wk, bk, wv, bv


def _run_case(key, B, S, D, compute_dtype, atol, rtol, sum_tol):
    args = _make_inputs(key, B, S, D)
    out, attn = attention_block(*args, compute_dtype=compute_dtype)
    out = jax.block_until_ready(out)
    attn = jax.block_until_ready(attn)

    ref_out, ref_attn = _reference(*args)
    out_f = out.astype(jnp.float32)
    attn_f = attn.astype(jnp.float32)
    err_o = float(jnp.max(jnp.abs(out_f - ref_out)))
    err_a = float(jnp.max(jnp.abs(attn_f - ref_attn)))
    assert jnp.allclose(out_f, ref_out, atol=atol, rtol=rtol), (
        f"output mismatch (B={B},S={S},D={D},{compute_dtype}) max|err|={err_o}")
    assert jnp.allclose(attn_f, ref_attn, atol=atol, rtol=rtol), (
        f"attn mismatch (B={B},S={S},D={D},{compute_dtype}) max|err|={err_a}")
    # NOTE: on the bf16 path (approx reciprocal + bf16 storage) rows sum to 1
    # only to ~1e-3; renormalize downstream if exact normalization is needed.
    row_sums = jnp.sum(attn_f, axis=-1)
    assert jnp.allclose(row_sums, 1.0, atol=sum_tol), (
        f"attn rows do not sum to 1 (B={B},S={S},D={D},{compute_dtype})")


if __name__ == "__main__":
    key = jax.random.PRNGKey(0)

    # Small shape implied by the module (batch=2, seq=8, hidden=32):
    # f32 compute path -> tight tolerance against the f32 reference.
    _run_case(key, B=2, S=8, D=32, compute_dtype=jnp.float32,
              atol=5e-4, rtol=5e-4, sum_tol=1e-3)
    # bf16 path (bf16 MXU operands / exp / attn storage, f32 accumulation).
    _run_case(key, B=2, S=8, D=32, compute_dtype=jnp.bfloat16,
              atol=5e-2, rtol=5e-2, sum_tol=2e-2)

    # Multi-q-tile path (grid=(B, 4), K/V scratch reuse across q tiles).
    _run_case(key, B=2, S=512, D=64, compute_dtype=jnp.float32,
              atol=5e-4, rtol=5e-4, sum_tol=1e-3)
    _run_case(key, B=2, S=512, D=64, compute_dtype=jnp.bfloat16,
              atol=5e-2, rtol=5e-2, sum_tol=2e-2)

    print("KERNEL_OK")
</pallas_src>

<mosaic_0001>
module attributes {stable_mosaic.version = 11 : i64} {
  func.func @_attention_kernel(%arg0: i32, %arg1: i32, %arg2: memref<1x8x32xf32, #tpu.memory_space<vmem>>, %arg3: memref<32x32xf32, #tpu.memory_space<vmem>>, %arg4: memref<1x32xf32, #tpu.memory_space<vmem>>, %arg5: memref<32x32xf32, #tpu.memory_space<vmem>>, %arg6: memref<1x32xf32, #tpu.memory_space<vmem>>, %arg7: memref<32x32xf32, #tpu.memory_space<vmem>>, %arg8: memref<1x32xf32, #tpu.memory_space<vmem>>, %arg9: memref<1x8x32xf32, #tpu.memory_space<vmem>>, %arg10: memref<1x8x8xf32, #tpu.memory_space<vmem>>, %arg11: memref<8x32xf32, #tpu.memory_space<vmem>>, %arg12: memref<8x32xf32, #tpu.memory_space<vmem>>) attributes {dimension_semantics = [#tpu.dimension_semantics<parallel>, #tpu.dimension_semantics<arbitrary>], iteration_bounds = array<i64: 2, 1>, scalar_prefetch = 0 : i64, scratch_operands = 2 : i64, tpu.core_type = #tpu.core_type<tc>, window_params = [{transform_indices = @transform_0, window_bounds = array<i64: 1, 8, 32>}, {pipeline_mode = #tpu.pipeline_mode<synchronous>, transform_indices = @transform_1, window_bounds = array<i64: 32, 32>}, {pipeline_mode = #tpu.pipeline_mode<synchronous>, transform_indices = @transform_2, window_bounds = array<i64: 1, 32>}, {pipeline_mode = #tpu.pipeline_mode<synchronous>, transform_indices = @transform_3, window_bounds = array<i64: 32, 32>}, {pipeline_mode = #tpu.pipeline_mode<synchronous>, transform_indices = @transform_4, window_bounds = array<i64: 1, 32>}, {pipeline_mode = #tpu.pipeline_mode<synchronous>, transform_indices = @transform_5, window_bounds = array<i64: 32, 32>}, {pipeline_mode = #tpu.pipeline_mode<synchronous>, transform_indices = @transform_6, window_bounds = array<i64: 1, 32>}, {transform_indices = @transform_7, window_bounds = array<i64: 1, 8, 32>}, {transform_indices = @transform_8, window_bounds = array<i64: 1, 8, 8>}]} {
    %c0_i32 = arith.constant 0 : i32
    %0 = arith.cmpi eq, %arg1, %c0_i32 : i32
    %1 = arith.extui %0 : i1 to i32
    %c0_i32_0 = arith.constant 0 : i32
    %2 = arith.cmpi ne, %1, %c0_i32_0 : i32
    scf.if %2 {
      %c0_21 = arith.constant 0 : index
      %c0_22 = arith.constant 0 : index
      %c0_23 = arith.constant 0 : index
      %35 = vector.load %arg2[%c0_21, %c0_22, %c0_23] : memref<1x8x32xf32, #tpu.memory_space<vmem>>, vector<1x8x32xf32>
      %36 = vector.shape_cast %35 : vector<1x8x32xf32> to vector<8x32xf32>
      %c0_24 = arith.constant 0 : index
      %c0_25 = arith.constant 0 : index
      %37 = vector.load %arg5[%c0_24, %c0_25] : memref<32x32xf32, #tpu.memory_space<vmem>>, vector<32x32xf32>
      %cst_26 = arith.constant dense<0.000000e+00> : vector<8x32xf32>
      %38 = tpu.matmul %36, %37, %cst_26 {dimension_numbers = #tpu.dot_dimension_numbers<[1], [0], [0], [1], [0, 0, 1, 1], [], []>} : vector<8x32xf32>, vector<32x32xf32>, vector<8x32xf32> -> vector<8x32xf32>
      %c0_27 = arith.constant 0 : index
      %c0_28 = arith.constant 0 : index
      %39 = vector.load %arg6[%c0_27, %c0_28] : memref<1x32xf32, #tpu.memory_space<vmem>>, vector<1x32xf32>
      %40 = vector.broadcast %39 : vector<1x32xf32> to vector<8x32xf32>
      %41 = arith.addf %38, %40 : vector<8x32xf32>
      %c0_29 = arith.constant 0 : index
      %c0_30 = arith.constant 0 : index
      %42 = vector.load %arg7[%c0_29, %c0_30] : memref<32x32xf32, #tpu.memory_space<vmem>>, vector<32x32xf32>
      %cst_31 = arith.constant dense<0.000000e+00> : vector<8x32xf32>
      %43 = tpu.matmul %36, %42, %cst_31 {dimension_numbers = #tpu.dot_dimension_numbers<[1], [0], [0], [1], [0, 0, 1, 1], [], []>} : vector<8x32xf32>, vector<32x32xf32>, vector<8x32xf32> -> vector<8x32xf32>
      %c0_32 = arith.constant 0 : index
      %c0_33 = arith.constant 0 : index
      %44 = vector.load %arg8[%c0_32, %c0_33] : memref<1x32xf32, #tpu.memory_space<vmem>>, vector<1x32xf32>
      %45 = vector.broadcast %44 : vector<1x32xf32> to vector<8x32xf32>
      %46 = arith.addf %43, %45 : vector<8x32xf32>
      %c0_34 = arith.constant 0 : index
      %c0_35 = arith.constant 0 : index
      %47 = vector.load %arg11[%c0_34, %c0_35] : memref<8x32xf32, #tpu.memory_space<vmem>>, vector<8x32xf32>
      tpu.vector_store %arg11[%c0_34, %c0_35], %41 {strides = array<i32>} : memref<8x32xf32, #tpu.memory_space<vmem>>, vector<8x32xf32>,
      %c0_36 = arith.constant 0 : index
      %c0_37 = arith.constant 0 : index
      %48 = vector.load %arg12[%c0_36, %c0_37] : memref<8x32xf32, #tpu.memory_space<vmem>>, vector<8x32xf32>
      tpu.vector_store %arg12[%c0_36, %c0_37], %46 {strides = array<i32>} : memref<8x32xf32, #tpu.memory_space<vmem>>, vector<8x32xf32>,
    } else {
    }
    %c8_i32 = arith.constant 8 : i32
    %3 = arith.muli %arg1, %c8_i32 : i32
    %4 = tpu.assume_multiple %3, 8 : i32
    %c0 = arith.constant 0 : index
    %5 = arith.index_cast %4 : i32 to index
    %c0_1 = arith.constant 0 : index
    %6 = vector.load %arg2[%c0, %5, %c0_1] : memref<1x8x32xf32, #tpu.memory_space<vmem>>, vector<1x8x32xf32>
    %7 = vector.shape_cast %6 : vector<1x8x32xf32> to vector<8x32xf32>
    %c0_2 = arith.constant 0 : index
    %c0_3 = arith.constant 0 : index
    %8 = vector.load %arg3[%c0_2, %c0_3] : memref<32x32xf32, #tpu.memory_space<vmem>>, vector<32x32xf32>
    %cst = arith.constant dense<0.000000e+00> : vector<8x32xf32>
    %9 = tpu.matmul %7, %8, %cst {dimension_numbers = #tpu.dot_dimension_numbers<[1], [0], [0], [1], [0, 0, 1, 1], [], []>} : vector<8x32xf32>, vector<32x32xf32>, vector<8x32xf32> -> vector<8x32xf32>
    %c0_4 = arith.constant 0 : index
    %c0_5 = arith.constant 0 : index
    %10 = vector.load %arg4[%c0_4, %c0_5] : memref<1x32xf32, #tpu.memory_space<vmem>>, vector<1x32xf32>
    %11 = vector.broadcast %10 : vector<1x32xf32> to vector<8x32xf32>
    %12 = arith.addf %9, %11 : vector<8x32xf32>
    %cst_6 = arith.constant 0.176776692 : f32
    %13 = vector.broadcast %cst_6 : f32 to vector<8x32xf32>
    %14 = arith.mulf %12, %13 : vector<8x32xf32>
    %c0_7 = arith.constant 0 : index
    %c0_8 = arith.constant 0 : index
    %15 = vector.load %arg11[%c0_7, %c0_8] : memref<8x32xf32, #tpu.memory_space<vmem>>, vector<8x32xf32>
    %cst_9 = arith.constant dense<0.000000e+00> : vector<8x8xf32>
    %16 = tpu.matmul %14, %15, %cst_9 {dimension_numbers = #tpu.dot_dimension_numbers<[1], [1], [0], [0], [0, 0, 1, 0], [], []>} : vector<8x32xf32>, vector<8x32xf32>, vector<8x8xf32> -> vector<8x8xf32>
    %cst_10 = arith.constant dense<0xFF800000> : vector<8xf32>
    %17 = vector.multi_reduction <maximumf>, %16, %cst_10 [1] : vector<8x8xf32> to vector<8xf32>
    %18 = vector.shape_cast %17 : vector<8xf32> to vector<8x1xf32>
    %19 = vector.broadcast %18 : vector<8x1xf32> to vector<8x8xf32>
    %20 = arith.subf %16, %19 : vector<8x8xf32>
    %21 = math.exp %20 : vector<8x8xf32>
    %cst_11 = arith.constant dense<0.000000e+00> : vector<8xf32>
    %22 = vector.multi_reduction <add>, %21, %cst_11 [1] : vector<8x8xf32> to vector<8xf32>
    %23 = vector.shape_cast %22 : vector<8xf32> to vector<8x1xf32>
    %24 = tpu.reciprocal %23 : vector<8x1xf32> -> vector<8x1xf32>
    %25 = vector.broadcast %24 : vector<8x1xf32> to vector<8x8xf32>
    %26 = arith.mulf %21, %25 : vector<8x8xf32>
    %c0_12 = arith.constant 0 : index
    %c0_13 = arith.constant 0 : index
    %27 = vector.load %arg12[%c0_12, %c0_13] : memref<8x32xf32, #tpu.memory_space<vmem>>, vector<8x32xf32>
    %cst_14 = arith.constant dense<0.000000e+00> : vector<8x32xf32>
    %28 = tpu.matmul %26, %27, %cst_14 {dimension_numbers = #tpu.dot_dimension_numbers<[1], [0], [0], [1], [0, 0, 1, 1], [], []>} : vector<8x8xf32>, vector<8x32xf32>, vector<8x32xf32> -> vector<8x32xf32>
    %c0_15 = arith.constant 0 : index
    %c0_16 = arith.constant 0 : index
    %c0_17 = arith.constant 0 : index
    %29 = vector.load %arg9[%c0_15, %c0_16, %c0_17] : memref<1x8x32xf32, #tpu.memory_space<vmem>>, vector<1x8x32xf32>
    %30 = vector.shape_cast %29 : vector<1x8x32xf32> to vector<8x32xf32>
    %31 = vector.shape_cast %28 : vector<8x32xf32> to vector<1x8x32xf32>
    tpu.vector_store %arg9[%c0_15, %c0_16, %c0_17], %31 {strides = array<i32>} : memref<1x8x32xf32, #tpu.memory_space<vmem>>, vector<1x8x32xf32>,
    %c0_18 = arith.constant 0 : index
    %c0_19 = arith.constant 0 : index
    %c0_20 = arith.constant 0 : index
    %32 = vector.load %arg10[%c0_18, %c0_19, %c0_20] : memref<1x8x8xf32, #tpu.memory_space<vmem>>, vector<1x8x8xf32>
    %33 = vector.shape_cast %32 : vector<1x8x8xf32> to vector<8x8xf32>
    %34 = vector.shape_cast %26 : vector<8x8xf32> to vector<1x8x8xf32>
    tpu.vector_store %arg10[%c0_18, %c0_19, %c0_20], %34 {strides = array<i32>} : memref<1x8x8xf32, #tpu.memory_space<vmem>>, vector<1x8x8xf32>,
    return
  }
  func.func @transform_0(%arg0: i32, %arg1: i32) -> (i32, i32, i32) {
    %c0_i32 = arith.constant 0 : i32
    %c0_i32_0 = arith.constant 0 : i32
    %c0_i32_1 = arith.constant 0 : i32
    return %arg0, %c0_i32, %c0_i32_0 : i32, i32, i32
  }
  func.func @transform_1(%arg0: i32, %arg1: i32) -> (i32, i32) {
    %c0_i32 = arith.constant 0 : i32
    %c0_i32_0 = arith.constant 0 : i32
    %c0_i32_1 = arith.constant 0 : i32
    return %c0_i32, %c0_i32_0 : i32, i32
  }
  func.func @transform_2(%arg0: i32, %arg1: i32) -> (i32, i32) {
    %c0_i32 = arith.constant 0 : i32
    %c0_i32_0 = arith.constant 0 : i32
    %c0_i32_1 = arith.constant 0 : i32
    return %c0_i32, %c0_i32_0 : i32, i32
  }
  func.func @transform_3(%arg0: i32, %arg1: i32) -> (i32, i32) {
    %c0_i32 = arith.constant 0 : i32
    %c0_i32_0 = arith.constant 0 : i32
    %c0_i32_1 = arith.constant 0 : i32
    return %c0_i32, %c0_i32_0 : i32, i32
  }
  func.func @transform_4(%arg0: i32, %arg1: i32) -> (i32, i32) {
    %c0_i32 = arith.constant 0 : i32
    %c0_i32_0 = arith.constant 0 : i32
    %c0_i32_1 = arith.constant 0 : i32
    return %c0_i32, %c0_i32_0 : i32, i32
  }
  func.func @transform_5(%arg0: i32, %arg1: i32) -> (i32, i32) {
    %c0_i32 = arith.constant 0 : i32
    %c0_i32_0 = arith.constant 0 : i32
    %c0_i32_1 = arith.constant 0 : i32
    return %c0_i32, %c0_i32_0 : i32, i32
  }
  func.func @transform_6(%arg0: i32, %arg1: i32) -> (i32, i32) {
    %c0_i32 = arith.constant 0 : i32
    %c0_i32_0 = arith.constant 0 : i32
    %c0_i32_1 = arith.constant 0 : i32
    return %c0_i32, %c0_i32_0 : i32, i32
  }
  func.func @transform_7(%arg0: i32, %arg1: i32) -> (i32, i32, i32) {
    %c0_i32 = arith.constant 0 : i32
    %c0_i32_0 = arith.constant 0 : i32
    return %arg0, %arg1, %c0_i32 : i32, i32, i32
  }
  func.func @transform_8(%arg0: i32, %arg1: i32) -> (i32, i32, i32) {
    %c0_i32 = arith.constant 0 : i32
    %c0_i32_0 = arith.constant 0 : i32
    return %arg0, %arg1, %c0_i32 : i32, i32, i32
  }
}

</mosaic_0001>

<llo_original>
// kernel: tpu_custom_call.1
$region0: #{tpu_custom_call.1}
  #allocation0 [shape = 'u32[]', space=smem, size = 0x4, offset = 0x4, fixed_abs, tag = 'smem constant byte address 0x4 - core index']
  #allocation1 [shape = 'u32[144,128]{1,0:T(1,128)}', space=vmem, size = 0x12000, scoped, tag = 'internal scratch']
  #allocation2 [shape = 'f32[8,32]{1,0:T(8,128)}', space=vmem, size = 0x1000, scoped, tag = 'scratch operand']
  #allocation3 [shape = 'f32[8,32]{1,0:T(8,128)}', space=vmem, size = 0x1000, scoped, tag = 'scratch operand']
  %s0 = inlined_call_operand.hbm [shape: f32[2,8,32], index: 0, kind: input, shape index: {}]
  %s1 = inlined_call_operand.hbm [shape: f32[32,32], index: 1, kind: input, shape index: {}]
  %s2 = inlined_call_operand.vmem [shape: f32[1,32], index: 2, kind: input, shape index: {}]
  %s3 = inlined_call_operand.hbm [shape: f32[32,32], index: 3, kind: input, shape index: {}]
  %s4 = inlined_call_operand.vmem [shape: f32[1,32], index: 4, kind: input, shape index: {}]
  %s5 = inlined_call_operand.hbm [shape: f32[32,32], index: 5, kind: input, shape index: {}]
  %s6 = inlined_call_operand.vmem [shape: f32[1,32], index: 6, kind: input, shape index: {}]
  %s7 = inlined_call_operand.hbm [shape: f32[2,8,32], index: 7, kind: output, shape index: {0}]
  %s8 = inlined_call_operand.hbm [shape: f32[2,8,8], index: 8, kind: output, shape index: {1}]
  %9 = xla_tuple %s7, %s8
  %s10 = sld [smem:[#allocation0]]
  $region89: #{tpu_custom_call.1} parent=0
    _
  %s12 = ssub.s32 1, %s10
  %s13 = scalar_select 0, %s12, %s10
  $region1: #{tpu_custom_call.1} parent=0
    #allocation4 [shape = 'u8[8192]{0}', space=vmem, size = 0x2000, scoped, tag = 'input window, operand 0']
    #allocation5 [shape = 's32[2]{0}', space=sflag, size = 0x8, scoped, tag = 'scoped memory for tpu_custom_call.1']
    #allocation6 [shape = 's32[2]{0}', space=sflag, size = 0x8, scoped, tag = 'scoped memory for tpu_custom_call.1']
    #allocation7 [shape = 'u8[16384]{0}', space=vmem, size = 0x4000, scoped, tag = 'input window, operand 1, single buffered']
    #allocation8 [shape = 's32[1]{0}', space=sflag, size = 0x4, scoped, tag = 'scoped memory for tpu_custom_call.1']
    #allocation9 [shape = 'u8[16384]{0}', space=vmem, size = 0x4000, scoped, tag = 'input window, operand 3, single buffered']
    #allocation10 [shape = 'u8[16384]{0}', space=vmem, size = 0x4000, scoped, tag = 'input window, operand 5, single buffered']
    #allocation11 [shape = 's32[1]{0}', space=sflag, size = 0x4, scoped, tag = 'scoped memory for tpu_custom_call.1']
    #allocation12 [shape = 'u8[8192]{0}', space=vmem, size = 0x2000, scoped, tag = 'output window, operand 0']
    #allocation13 [shape = 'u8[8192]{0}', space=vmem, size = 0x2000, scoped, tag = 'output window, operand 1']
    #allocation14 [shape = 's32[2]{0}', space=sflag, size = 0x8, scoped, tag = 'scoped memory for tpu_custom_call.1']
    %14 = vsyncpa [#allocation5], 0
    %s15 = scalar_lea.sflag [#allocation5], 1
    %16 = vsyncpa %s15, 0
    %17 = vsyncpa [#allocation8], 0
    %18 = vsyncpa [#allocation11], 0
    %19 = vsyncpa [#allocation6], 0
    %s20 = scalar_lea.sflag [#allocation6], 1
    %21 = vsyncpa %s20, 0
    %22 = vsyncpa [#allocation14], 0
    %s23 = scalar_lea.sflag [#allocation14], 1
    %24 = vsyncpa %s23, 0
    loop: start=0, step=1, limit=4
    $region2: #{tpu_custom_call.1} parent=1 // loop_pre_header
      _
    $region3: #{tpu_custom_call.1} parent=1 // loop_header
      %s26 = sphi 0, %s30
      %p27 = scmp.ge.s32.totalorder %s26, 4
      %s33 = sphi 0, %s45
      %s34 = sphi 0, %s41
      %s35 = sphi 0, %s33
      %s36 = sphi 0, %s34
      %s37 = sphi 0, %s35
      %s38 = sphi 0, %s36
      %s48 = sphi 0, %s50
      %s51 = sphi 0, %s48
      %s52 = sphi 0, %s51
      %s68 = sphi 0, %s52
      %s72 = sphi 0, %s72
      %s74 = sphi 0, %s72
      %s75 = sphi 0, %s74
      %s89 = sphi 0, %s75
      %s93 = sphi 0, %s93
      %s95 = sphi 0, %s93
      %s96 = sphi 0, %s95
      %s110 = sphi 0, %s96
      %s114 = sphi 0, %s114
      %s116 = sphi 0, %s114
      %s117 = sphi 0, %s116
      %s131 = sphi 0, %s117
      %s135 = sphi 0, %s135
      %s137 = sphi 0, %s135
      %s138 = sphi 0, %s137
      %s152 = sphi 0, %s138
      %s156 = sphi 0, %s156
      %s158 = sphi 0, %s156
      %s159 = sphi 0, %s158
      %s173 = sphi 0, %s159
      %s177 = sphi 0, %s177
      %s179 = sphi 0, %s177
      %s180 = sphi 0, %s179
      %s194 = sphi 0, %s180
      %s202 = sphi 0, %s204
      %s205 = sphi 0, %s202
      %s206 = sphi 0, %s205
      %s222 = sphi 0, %s206
      %s230 = sphi 0, %s232
      %s233 = sphi 0, %s230
      %s234 = sphi 0, %s233
      %s250 = sphi 0, %s234
    $region4: #{tpu_custom_call.1} parent=1 // loop_header_branch
      %29 = sbr.rel (%p27) target = $region8
    $region5: #{tpu_custom_call.1} parent=1 // loop_body
      %s31 = ssub.s32 %s26, 1
      %s32 = ssub.s32 %s26, 2
      %s39 = sadd.s32 1, %s34
      %p40 = scmp.ge.s32.totalorder %s39, 1
      %s41 = scalar_select %p40, 0, %s39
      %s42 = sadd.s32 1, %s33
      %s43 = scalar_select %p40, %s42, %s33
      %p44 = scmp.ge.s32.totalorder %s43, 2
      %s45 = scalar_select %p44, 0, %s43
      %s46 = ssub.s32 %s33, %s45
      %p47 = scmp.eq.s32.totalorder %s46, 0
      %s49 = sadd.s32 %s48, 1
      %s50 = scalar_select %p47, %s48, %s49
      %p53 = pneg %p47
      %p54 = scmp.eq.s32.totalorder %s26, 1
      %p55 = por %p53, %p54
      %p56 = scmp.ne.s32.totalorder %s48, %s51
      %p57 = scmp.eq.s32.totalorder %s26, 0
      %p58 = por %p56, %p57
      %p59 = scmp.ne.s32.totalorder %s48, %s51
      %p60 = scmp.eq.s32.totalorder %s31, 1
      %p61 = por %p59, %p60
      %p62 = scmp.ne.s32.totalorder %s51, %s52
      %p63 = scmp.eq.s32.totalorder %s31, 0
      %p64 = por %p62, %p63
      %p65 = scmp.ne.s32.totalorder %s51, %s52
      %p66 = scmp.eq.s32.totalorder %s32, 1
      %p67 = por %p65, %p66
      %p69 = scmp.ne.s32.totalorder %s52, %s68
      %p70 = scmp.eq.s32.totalorder %s32, 0
      %p71 = por %p69, %p70
      %s73 = sadd.s32 %s72, 1
      %p76 = scmp.eq.s32.totalorder %s26, 1
      %p77 = scmp.ne.s32.totalorder %s72, %s74
      %p78 = scmp.eq.s32.totalorder %s26, 0
      %p79 = por %p77, %p78
      %p80 = scmp.ne.s32.totalorder %s72, %s74
      %p81 = scmp.eq.s32.totalorder %s31, 1
      %p82 = por %p80, %p81
      %p83 = scmp.ne.s32.totalorder %s74, %s75
      %p84 = scmp.eq.s32.totalorder %s31, 0
      %p85 = por %p83, %p84
      %p86 = scmp.ne.s32.totalorder %s74, %s75
      %p87 = scmp.eq.s32.totalorder %s32, 1
      %p88 = por %p86, %p87
      %p90 = scmp.ne.s32.totalorder %s75, %s89
      %p91 = scmp.eq.s32.totalorder %s32, 0
      %p92 = por %p90, %p91
      %s94 = sadd.s32 %s93, 1
      %p97 = scmp.eq.s32.totalorder %s26, 1
      %p98 = scmp.ne.s32.totalorder %s93, %s95
      %p99 = scmp.eq.s32.totalorder %s26, 0
      %p100 = por %p98, %p99
      %p101 = scmp.ne.s32.totalorder %s93, %s95
      %p102 = scmp.eq.s32.totalorder %s31, 1
      %p103 = por %p101, %p102
      %p104 = scmp.ne.s32.totalorder %s95, %s96
      %p105 = scmp.eq.s32.totalorder %s31, 0
      %p106 = por %p104, %p105
      %p107 = scmp.ne.s32.totalorder %s95, %s96
      %p108 = scmp.eq.s32.totalorder %s32, 1
      %p109 = por %p107, %p108
      %p111 = scmp.ne.s32.totalorder %s96, %s110
      %p112 = scmp.eq.s32.totalorder %s32, 0
      %p113 = por %p111, %p112
      %s115 = sadd.s32 %s114, 1
      %p118 = scmp.eq.s32.totalorder %s26, 1
      %p119 = scmp.ne.s32.totalorder %s114, %s116
      %p120 = scmp.eq.s32.totalorder %s26, 0
      %p121 = por %p119, %p120
      %p122 = scmp.ne.s32.totalorder %s114, %s116
      %p123 = scmp.eq.s32.totalorder %s31, 1
      %p124 = por %p122, %p123
      %p125 = scmp.ne.s32.totalorder %s116, %s117
      %p126 = scmp.eq.s32.totalorder %s31, 0
      %p127 = por %p125, %p126
      %p128 = scmp.ne.s32.totalorder %s116, %s117
      %p129 = scmp.eq.s32.totalorder %s32, 1
      %p130 = por %p128, %p129
      %p132 = scmp.ne.s32.totalorder %s117, %s131
      %p133 = scmp.eq.s32.totalorder %s32, 0
      %p134 = por %p132, %p133
      %s136 = sadd.s32 %s135, 1
      %p139 = scmp.eq.s32.totalorder %s26, 1
      %p140 = scmp.ne.s32.totalorder %s135, %s137
      %p141 = scmp.eq.s32.totalorder %s26, 0
      %p142 = por %p140, %p141
      %p143 = scmp.ne.s32.totalorder %s135, %s137
      %p144 = scmp.eq.s32.totalorder %s31, 1
      %p145 = por %p143, %p144
      %p146 = scmp.ne.s32.totalorder %s137, %s138
      %p147 = scmp.eq.s32.totalorder %s31, 0
      %p148 = por %p146, %p147
      %p149 = scmp.ne.s32.totalorder %s137, %s138
      %p150 = scmp.eq.s32.totalorder %s32, 1
      %p151 = por %p149, %p150
      %p153 = scmp.ne.s32.totalorder %s138, %s152
      %p154 = scmp.eq.s32.totalorder %s32, 0
      %p155 = por %p153, %p154
      %s157 = sadd.s32 %s156, 1
      %p160 = scmp.eq.s32.totalorder %s26, 1
      %p161 = scmp.ne.s32.totalorder %s156, %s158
      %p162 = scmp.eq.s32.totalorder %s26, 0
      %p163 = por %p161, %p162
      %p164 = scmp.ne.s32.totalorder %s156, %s158
      %p165 = scmp.eq.s32.totalorder %s31, 1
      %p166 = por %p164, %p165
      %p167 = scmp.ne.s32.totalorder %s158, %s159
      %p168 = scmp.eq.s32.totalorder %s31, 0
      %p169 = por %p167, %p168
      %p170 = scmp.ne.s32.totalorder %s158, %s159
      %p171 = scmp.eq.s32.totalorder %s32, 1
      %p172 = por %p170, %p171
      %p174 = scmp.ne.s32.totalorder %s159, %s173
      %p175 = scmp.eq.s32.totalorder %s32, 0
      %p176 = por %p174, %p175
      %s178 = sadd.s32 %s177, 1
      %p181 = scmp.eq.s32.totalorder %s26, 1
      %p182 = scmp.ne.s32.totalorder %s177, %s179
      %p183 = scmp.eq.s32.totalorder %s26, 0
      %p184 = por %p182, %p183
      %p185 = scmp.ne.s32.totalorder %s177, %s179
      %p186 = scmp.eq.s32.totalorder %s31, 1
      %p187 = por %p185, %p186
      %p188 = scmp.ne.s32.totalorder %s179, %s180
      %p189 = scmp.eq.s32.totalorder %s31, 0
      %p190 = por %p188, %p189
      %p191 = scmp.ne.s32.totalorder %s179, %s180
      %p192 = scmp.eq.s32.totalorder %s32, 1
      %p193 = por %p191, %p192
      %p195 = scmp.ne.s32.totalorder %s180, %s194
      %p196 = scmp.eq.s32.totalorder %s32, 0
      %p197 = por %p195, %p196
      %s198 = ssub.s32 %s33, %s45
      %s199 = ssub.s32 %s34, %s41
      %s200 = sor.u32 %s198, %s199
      %p201 = scmp.eq.s32.totalorder %s200, 0
      %s203 = sadd.s32 %s202, 1
      %s204 = scalar_select %p201, %s202, %s203
      %p207 = pneg %p201
      %p208 = scmp.eq.s32.totalorder %s26, 1
      %p209 = por %p207, %p208
      %p210 = scmp.ne.s32.totalorder %s202, %s205
      %p211 = scmp.eq.s32.totalorder %s26, 0
      %p212 = por %p210, %p211
      %p213 = scmp.ne.s32.totalorder %s202, %s205
      %p214 = scmp.eq.s32.totalorder %s31, 1
      %p215 = por %p213, %p214
      %p216 = scmp.ne.s32.totalorder %s205, %s206
      %p217 = scmp.eq.s32.totalorder %s31, 0
      %p218 = por %p216, %p217
      %p219 = scmp.ne.s32.totalorder %s205, %s206
      %p220 = scmp.eq.s32.totalorder %s32, 1
      %p221 = por %p219, %p220
      %p223 = scmp.ne.s32.totalorder %s206, %s222
      %p224 = scmp.eq.s32.totalorder %s32, 0
      %p225 = por %p223, %p224
      %s226 = ssub.s32 %s33, %s45
      %s227 = ssub.s32 %s34, %s41
      %s228 = sor.u32 %s226, %s227
      %p229 = scmp.eq.s32.totalorder %s228, 0
      %s231 = sadd.s32 %s230, 1
      %s232 = scalar_select %p229, %s230, %s231
      %p235 = pneg %p229
      %p236 = scmp.eq.s32.totalorder %s26, 1
      %p237 = por %p235, %p236
      %p238 = scmp.ne.s32.totalorder %s230, %s233
      %p239 = scmp.eq.s32.totalorder %s26, 0
      %p240 = por %p238, %p239
      %p241 = scmp.ne.s32.totalorder %s230, %s233
      %p242 = scmp.eq.s32.totalorder %s31, 1
      %p243 = por %p241, %p242
      %p244 = scmp.ne.s32.totalorder %s233, %s234
      %p245 = scmp.eq.s32.totalorder %s31, 0
      %p246 = por %p244, %p245
      %p247 = scmp.ne.s32.totalorder %s233, %s234
      %p248 = scmp.eq.s32.totalorder %s32, 1
      %p249 = por %p247, %p248
      %p251 = scmp.ne.s32.totalorder %s234, %s250
      %p252 = scmp.eq.s32.totalorder %s32, 0
      %p253 = por %p251, %p252
      %p254 = scmp.le.s32.totalorder 1, %s26
      %p255 = scmp.lt.s32.totalorder %s26, 3
      %p256 = pnand %p254, %p255
      %p257 = pneg %p256
      // Predicated region
      $region9: #{tpu_custom_call.1} parent=5 // pred_check
        _
      $region10: #{tpu_custom_call.1} parent=5 // pred_check_branch
        %259 = sbr.rel (%p256) target = $region12
      $region11: #{tpu_custom_call.1} parent=5 // pred_region
        %s260 = ssub.s32 %s26, 1
        // Predicated region
        $region13: #{tpu_custom_call.1} parent=11 // pred_check
          %p261 = pneg %p85
        $region14: #{tpu_custom_call.1} parent=11 // pred_check_branch
          %263 = sbr.rel (%p261) target = $region16
        $region15: #{tpu_custom_call.1} parent=11 // pred_region
          %s265 = ssub.s32 512, 512
          %266 = vsyncadd [#allocation8], %s265
          %s267 = sshll.u32 [#allocation7], 4
          %s268 = int_to_ptr.vmem [resolvable:$true] %s267
          %273 = dma.hbm_to_vmem [thread:$0]  %s1, 512, %s268, [#allocation8], 128, 128, 8
        $region16: #{tpu_custom_call.1} parent=11 // pred_fallthru
          _
        // Predicated region
        $region17: #{tpu_custom_call.1} parent=11 // pred_check
          %p274 = pneg %p106
        $region18: #{tpu_custom_call.1} parent=11 // pred_check_branch
          %276 = sbr.rel (%p274) target = $region20
        $region19: #{tpu_custom_call.1} parent=11 // pred_region
          _
        $region20: #{tpu_custom_call.1} parent=11 // pred_fallthru
          _
        // Predicated region
        $region21: #{tpu_custom_call.1} parent=11 // pred_check
          %p277 = pneg %p127
        $region22: #{tpu_custom_call.1} parent=11 // pred_check_branch
          %279 = sbr.rel (%p277) target = $region24
        $region23: #{tpu_custom_call.1} parent=11 // pred_region
          %s281 = ssub.s32 512, 512
          %282 = vsyncadd [#allocation8], %s281
          %s283 = sshll.u32 [#allocation9], 4
          %s284 = int_to_ptr.vmem [resolvable:$true] %s283
          %289 = dma.hbm_to_vmem [thread:$0]  %s3, 512, %s284, [#allocation8], 128, 128, 8
        $region24: #{tpu_custom_call.1} parent=11 // pred_fallthru
          _
        // Predicated region
        $region25: #{tpu_custom_call.1} parent=11 // pred_check
          %p290 = pneg %p148
        $region26: #{tpu_custom_call.1} parent=11 // pred_check_branch
          %292 = sbr.rel (%p290) target = $region28
        $region27: #{tpu_custom_call.1} parent=11 // pred_region
          _
        $region28: #{tpu_custom_call.1} parent=11 // pred_fallthru
          _
        // Predicated region
        $region29: #{tpu_custom_call.1} parent=11 // pred_check
          %p293 = pneg %p169
        $region30: #{tpu_custom_call.1} parent=11 // pred_check_branch
          %295 = sbr.rel (%p293) target = $region32
        $region31: #{tpu_custom_call.1} parent=11 // pred_region
          %s297 = ssub.s32 512, 512
          %298 = vsyncadd [#allocation11], %s297
          %s299 = sshll.u32 [#allocation10], 4
          %s300 = int_to_ptr.vmem [resolvable:$true] %s299
          %305 = dma.hbm_to_vmem [thread:$0]  %s5, 512, %s300, [#allocation11], 128, 128, 8
        $region32: #{tpu_custom_call.1} parent=11 // pred_fallthru
          _
        // Predicated region
        $region33: #{tpu_custom_call.1} parent=11 // pred_check
          %p306 = pneg %p190
        $region34: #{tpu_custom_call.1} parent=11 // pred_check_branch
          %308 = sbr.rel (%p306) target = $region36
        $region35: #{tpu_custom_call.1} parent=11 // pred_region
          _
        $region36: #{tpu_custom_call.1} parent=11 // pred_fallthru
          _
      $region12: #{tpu_custom_call.1} parent=5 // pred_fallthru
        _
      %p309 = scmp.lt.s32.totalorder %s26, 2
      // Predicated region
      $region37: #{tpu_custom_call.1} parent=5 // pred_check
        %p310 = pneg %p309
      $region38: #{tpu_custom_call.1} parent=5 // pred_check_branch
        %312 = sbr.rel (%p310) target = $region40
      $region39: #{tpu_custom_call.1} parent=5 // pred_region
        // Predicated region
        $region41: #{tpu_custom_call.1} parent=39 // pred_check
          %p313 = pneg %p58
        $region42: #{tpu_custom_call.1} parent=39 // pred_check_branch
          %315 = sbr.rel (%p313) target = $region44
        $region43: #{tpu_custom_call.1} parent=39 // pred_region
          %s316 = sand.u32 %s48, 1
          %s317 = scalar_lea.sflag [#allocation5], %s316
          %s318 = sand.u32 %s48, 1
          %s319 = smul.addr %s318, 8
          %s320 = scalar_lea.vmem [#allocation4], %s319
          %s322 = ssub.s32 128, 128
          %323 = vsyncadd %s317, %s322
          %s324 = smul.addr %s33, 128
          %s325 = scalar_lea.hbm %s0, %s324
          %s327 = sshll.u32 %s320, 4
          %s328 = int_to_ptr.vmem [resolvable:$true] %s327
          %330 = dma.hbm_to_vmem [thread:$0]  %s325, 128, %s328, %s317
        $region44: #{tpu_custom_call.1} parent=39 // pred_fallthru
          _
      $region40: #{tpu_custom_call.1} parent=5 // pred_fallthru
        _
      %p331 = scmp.le.s32.totalorder 1, %s26
      %p332 = scmp.lt.s32.totalorder %s26, 3
      %p333 = pnand %p331, %p332
      %p334 = pneg %p333
      // Predicated region
      $region45: #{tpu_custom_call.1} parent=5 // pred_check
        _
      $region46: #{tpu_custom_call.1} parent=5 // pred_check_branch
        %336 = sbr.rel (%p333) target = $region48
      $region47: #{tpu_custom_call.1} parent=5 // pred_region
        %s337 = ssub.s32 %s26, 1
        %s338 = sand.u32 %s51, 1
        %s339 = scalar_lea.sflag [#allocation5], %s338
        %s340 = sand.u32 %s51, 1
        %s341 = smul.addr %s340, 8
        %s342 = scalar_lea.vmem [#allocation4], %s341
        // Predicated region
        $region49: #{tpu_custom_call.1} parent=47 // pred_check
          %p343 = pneg %p64
        $region50: #{tpu_custom_call.1} parent=47 // pred_check_branch
          %345 = sbr.rel (%p343) target = $region52
        $region51: #{tpu_custom_call.1} parent=47 // pred_region
          %346 = dma.done %s339, 128
        $region52: #{tpu_custom_call.1} parent=47 // pred_fallthru
          _
        // Predicated region
        $region53: #{tpu_custom_call.1} parent=47 // pred_check
          %p347 = pneg %p85
        $region54: #{tpu_custom_call.1} parent=47 // pred_check_branch
          %349 = sbr.rel (%p347) target = $region56
        $region55: #{tpu_custom_call.1} parent=47 // pred_region
          %350 = dma.done [#allocation8], 512
        $region56: #{tpu_custom_call.1} parent=47 // pred_fallthru
          _
        // Predicated region
        $region57: #{tpu_custom_call.1} parent=47 // pred_check
          %p351 = pneg %p127
        $region58: #{tpu_custom_call.1} parent=47 // pred_check_branch
          %353 = sbr.rel (%p351) target = $region60
        $region59: #{tpu_custom_call.1} parent=47 // pred_region
          %354 = dma.done [#allocation8], 512
        $region60: #{tpu_custom_call.1} parent=47 // pred_fallthru
          _
        // Predicated region
        $region61: #{tpu_custom_call.1} parent=47 // pred_check
          %p355 = pneg %p169
        $region62: #{tpu_custom_call.1} parent=47 // pred_check_branch
          %357 = sbr.rel (%p355) target = $region64
        $region63: #{tpu_custom_call.1} parent=47 // pred_region
          %358 = dma.done [#allocation11], 512
        $region64: #{tpu_custom_call.1} parent=47 // pred_fallthru
          _
        %s359 = sand.u32 %s51, 1
        %s360 = scalar_lea.sflag [#allocation5], %s359
        %s361 = sand.u32 %s51, 1
        %s362 = smul.addr %s361, 8
        %s363 = scalar_lea.vmem [#allocation4], %s362
        %p364 = pneg %p64
        %p365 = pneg %p61
        %p366 = pneg %p85
        %p367 = pneg %p82
        %p368 = pneg %p106
        %p369 = pneg %p103
        %p370 = pneg %p127
        %p371 = pneg %p124
        %p372 = pneg %p148
        %p373 = pneg %p145
        %p374 = pneg %p169
        %p375 = pneg %p166
        %p376 = pneg %p190
        %p377 = pneg %p187
        %p378 = pneg %p218
        %p379 = pneg %p215
        %s380 = sand.u32 %s205, 1
        %s381 = scalar_lea.sflag [#allocation6], %s380
        %s382 = sand.u32 %s205, 1
        %s383 = smul.addr %s382, 8
        %s384 = scalar_lea.vmem [#allocation12], %s383
        %p385 = pneg %p246
        %p386 = pneg %p243
        %s387 = sand.u32 %s233, 1
        %s388 = scalar_lea.sflag [#allocation14], %s387
        %s389 = sand.u32 %s233, 1
        %s390 = smul.addr %s389, 8
        %s391 = scalar_lea.vmem [#allocation13], %s390
        %p392 = scmp.eq.s32.totalorder %s36, 0
        // Predicated region
        $region65: #{tpu_custom_call.1} parent=47 // pred_check
          %p393 = pneg %p392
        $region66: #{tpu_custom_call.1} parent=47 // pred_check_branch
          %395 = sbr.rel (%p393) target = $region68
        $region67: #{tpu_custom_call.1} parent=47 // pred_region
          %v396 = vld [vmem:[%s342] sm:$0xff]
          %v397 = vld [vmem:[#allocation9] sm:$0xff]
          %v398 = vld [vmem:[#allocation9 + $0x8] sm:$0xff]
          %v399 = vld [vmem:[#allocation9 + $0x10] sm:$0xff]
          %v400 = vld [vmem:[#allocation9 + $0x18] sm:$0xff]
          %v401 = vld [vmem:[%s4] sm:$0x1]
          %v403 = vlaneseq
          %v404 = vshrl.u32 %v403, 7
          %v405 = vsub.s32 0, %v404
          %v406 = vrot.slane %v401, %v405
          %vm408 = vcmask 261120
          %v410 = vsel %vm408, %v396, 0
          %412 = vmatprep.subr.mxu0 0.0
          %413 = vmatpush1.msra.mxu0 %v397
          %414 = vmatprep.subr.mxu0 0.0
          %415 = vmatpush1.msra.mxu0 %v398
          %416 = vmatprep.subr.mxu0 0.0
          %417 = vmatpush1.msra.mxu0 %v399
          %418 = vmatprep.subr.mxu0 0.0
          %419 = vmatpush1.msra.mxu0 %v400
          %420 = vmatprep.subr.mxu0 0.0
          %421 = vmatpush1.msra.mxu0 0.0
          %422 = vmatprep.subr.mxu0 0.0
          %423 = vmatpush1.msra.mxu0 0.0
          %424 = vmatprep.subr.mxu0 0.0
          %425 = vmatpush1.msra.mxu0 0.0
          %426 = vmatprep.subr.mxu0 0.0
          %427 = vmatpush1.msra.mxu0 0.0
          %428 = vmatprep.subr.mxu0 0.0
          %429 = vmatpush1.msra.mxu0 0.0
          %430 = vmatprep.subr.mxu0 0.0
          %431 = vmatpush1.msra.mxu0 0.0
          %432 = vmatprep.subr.mxu0 0.0
          %433 = vmatpush1.msra.mxu0 0.0
          %434 = vmatprep.subr.mxu0 0.0
          %435 = vmatpush1.msra.mxu0 0.0
          %436 = vmatprep.subr.mxu0 0.0
          %437 = vmatpush1.msra.mxu0 0.0
          %438 = vmatprep.subr.mxu0 0.0
          %439 = vmatpush1.msra.mxu0 0.0
          %440 = vmatprep.subr.mxu0 0.0
          %441 = vmatpush1.msra.mxu0 0.0
          %442 = vmatprep.subr.mxu0 0.0
          %443 = vmatpush1.msra.mxu0 0.0
          %444 = vmatprep.subr.mxu0 0.0
          %445 = vmatpush1.msra.mxu0 0.0
          %446 = vmatprep.subr.mxu0 0.0
          %447 = vmatpush1.msra.mxu0 0.0
          %448 = vmatprep.subr.mxu0 0.0
          %449 = vmatpush1.msra.mxu0 0.0
          %450 = vmatprep.subr.mxu0 0.0
          %451 = vmatpush1.msra.mxu0 0.0
          %452 = vmatprep.subr.mxu0 0.0
          %453 = vmatpush1.msra.mxu0 0.0
          %454 = vmatprep.subr.mxu0 0.0
          %455 = vmatpush1.msra.mxu0 0.0
          %456 = vmatprep.subr.mxu0 0.0
          %457 = vmatpush1.msra.mxu0 0.0
          %458 = vmatprep.subr.mxu0 0.0
          %459 = vmatpush1.msra.mxu0 0.0
          %460 = vmatprep.subr.mxu0 0.0
          %461 = vmatpush1.msra.mxu0 0.0
          %462 = vmatprep.subr.mxu0 0.0
          %463 = vmatpush1.msra.mxu0 0.0
          %464 = vmatprep.subr.mxu0 0.0
          %465 = vmatpush1.msra.mxu0 0.0
          %466 = vmatprep.subr.mxu0 0.0
          %467 = vmatpush1.msra.mxu0 0.0
          %468 = vmatprep.subr.mxu0 0.0
          %469 = vmatpush1.msra.mxu0 0.0
          %470 = vmatprep.subr.mxu0 0.0
          %471 = vmatpush1.msra.mxu0 0.0
          %472 = vmatprep.subr.mxu0 0.0
          %473 = vmatpush1.msra.mxu0 0.0
          %474 = vmatprep.subr.mxu0 0.0
          %475 = vmatpush1.msra.mxu0 0.0
          %476 = vmatprep.mubr.f32.mxu0 0.0
          %477 = vmatmul.mubr.f32.gmra.mrb[0].mxu0 %v410
          %v478 = vpop.f32.mrb[0].mxu0
          %v479 = vadd.f32 %v406, %v478
          %v480 = vpop.f32.mrb[0].mxu0
          %481 = vdwg.mxu0
          %v482 = vld [vmem:[#allocation10] sm:$0xff]
          %v483 = vld [vmem:[#allocation10 + $0x8] sm:$0xff]
          %v484 = vld [vmem:[#allocation10 + $0x10] sm:$0xff]
          %v485 = vld [vmem:[#allocation10 + $0x18] sm:$0xff]
          %v486 = vld [vmem:[%s6] sm:$0x1]
          %v488 = vlaneseq
          %v489 = vshrl.u32 %v488, 7
          %v490 = vsub.s32 0, %v489
          %v491 = vrot.slane %v486, %v490
          %493 = vmatprep.subr.mxu0 0.0
          %494 = vmatpush1.msra.mxu0 %v482
          %495 = vmatprep.subr.mxu0 0.0
          %496 = vmatpush1.msra.mxu0 %v483
          %497 = vmatprep.subr.mxu0 0.0
          %498 = vmatpush1.msra.mxu0 %v484
          %499 = vmatprep.subr.mxu0 0.0
          %500 = vmatpush1.msra.mxu0 %v485
          %501 = vmatprep.subr.mxu0 0.0
          %502 = vmatpush1.msra.mxu0 0.0
          %503 = vmatprep.subr.mxu0 0.0
          %504 = vmatpush1.msra.mxu0 0.0
          %505 = vmatprep.subr.mxu0 0.0
          %506 = vmatpush1.msra.mxu0 0.0
          %507 = vmatprep.subr.mxu0 0.0
          %508 = vmatpush1.msra.mxu0 0.0
          %509 = vmatprep.subr.mxu0 0.0
          %510 = vmatpush1.msra.mxu0 0.0
          %511 = vmatprep.subr.mxu0 0.0
          %512 = vmatpush1.msra.mxu0 0.0
          %513 = vmatprep.subr.mxu0 0.0
          %514 = vmatpush1.msra.mxu0 0.0
          %515 = vmatprep.subr.mxu0 0.0
          %516 = vmatpush1.msra.mxu0 0.0
          %517 = vmatprep.subr.mxu0 0.0
          %518 = vmatpush1.msra.mxu0 0.0
          %519 = vmatprep.subr.mxu0 0.0
          %520 = vmatpush1.msra.mxu0 0.0
          %521 = vmatprep.subr.mxu0 0.0
          %522 = vmatpush1.msra.mxu0 0.0
          %523 = vmatprep.subr.mxu0 0.0
          %524 = vmatpush1.msra.mxu0 0.0
          %525 = vmatprep.subr.mxu0 0.0
          %526 = vmatpush1.msra.mxu0 0.0
          %527 = vmatprep.subr.mxu0 0.0
          %528 = vmatpush1.msra.mxu0 0.0
          %529 = vmatprep.subr.mxu0 0.0
          %530 = vmatpush1.msra.mxu0 0.0
          %531 = vmatprep.subr.mxu0 0.0
          %532 = vmatpush1.msra.mxu0 0.0
          %533 = vmatprep.subr.mxu0 0.0
          %534 = vmatpush1.msra.mxu0 0.0
          %535 = vmatprep.subr.mxu0 0.0
          %536 = vmatpush1.msra.mxu0 0.0
          %537 = vmatprep.subr.mxu0 0.0
          %538 = vmatpush1.msra.mxu0 0.0
          %539 = vmatprep.subr.mxu0 0.0
          %540 = vmatpush1.msra.mxu0 0.0
          %541 = vmatprep.subr.mxu0 0.0
          %542 = vmatpush1.msra.mxu0 0.0
          %543 = vmatprep.subr.mxu0 0.0
          %544 = vmatpush1.msra.mxu0 0.0
          %545 = vmatprep.subr.mxu0 0.0
          %546 = vmatpush1.msra.mxu0 0.0
          %547 = vmatprep.subr.mxu0 0.0
          %548 = vmatpush1.msra.mxu0 0.0
          %549 = vmatprep.subr.mxu0 0.0
          %550 = vmatpush1.msra.mxu0 0.0
          %551 = vmatprep.subr.mxu0 0.0
          %552 = vmatpush1.msra.mxu0 0.0
          %553 = vmatprep.subr.mxu0 0.0
          %554 = vmatpush1.msra.mxu0 0.0
          %555 = vmatprep.subr.mxu0 0.0
          %556 = vmatpush1.msra.mxu0 0.0
          %557 = vmatprep.mubr.f32.mxu0 0.0
          %558 = vmatmul.mubr.f32.gmra.mrb[0].mxu0 %v410
          %v559 = vpop.f32.mrb[0].mxu0
          %v560 = vadd.f32 %v491, %v559
          %v561 = vpop.f32.mrb[0].mxu0
          %562 = vdwg.mxu0
          %563 = vst.msk [vmem:[#allocation2] sm:$0xff] %vm408, %v479
          %564 = vst.msk [vmem:[#allocation3] sm:$0xff] %vm408, %v560
        $region68: #{tpu_custom_call.1} parent=47 // pred_fallthru
          _
        %s565 = smul.u32 %s36, 8
        %s566 = scalar_lea.vmem %s342, %s565 [#allocation4]
        %v567 = vld [vmem:[%s566] sm:$0xff]
        %v568 = vld [vmem:[#allocation7] sm:$0xff]
        %v569 = vld [vmem:[#allocation7 + $0x8] sm:$0xff]
        %v570 = vld [vmem:[#allocation7 + $0x10] sm:$0xff]
        %v571 = vld [vmem:[#allocation7 + $0x18] sm:$0xff]
        %v572 = vld [vmem:[%s2] sm:$0x1]
        %v574 = vlaneseq
        %v575 = vshrl.u32 %v574, 7
        %v576 = vsub.s32 0, %v575
        %v577 = vrot.slane %v572, %v576
        %vm579 = vcmask 261120
        %v581 = vsel %vm579, %v567, 0
        %583 = vmatprep.subr.mxu0 0.0
        %584 = vmatpush1.msra.mxu0 %v568
        %585 = vmatprep.subr.mxu0 0.0
        %586 = vmatpush1.msra.mxu0 %v569
        %587 = vmatprep.subr.mxu0 0.0
        %588 = vmatpush1.msra.mxu0 %v570
        %589 = vmatprep.subr.mxu0 0.0
        %590 = vmatpush1.msra.mxu0 %v571
        %591 = vmatprep.subr.mxu0 0.0
        %592 = vmatpush1.msra.mxu0 0.0
        %593 = vmatprep.subr.mxu0 0.0
        %594 = vmatpush1.msra.mxu0 0.0
        %595 = vmatprep.subr.mxu0 0.0
        %596 = vmatpush1.msra.mxu0 0.0
        %597 = vmatprep.subr.mxu0 0.0
        %598 = vmatpush1.msra.mxu0 0.0
        %599 = vmatprep.subr.mxu0 0.0
        %600 = vmatpush1.msra.mxu0 0.0
        %601 = vmatprep.subr.mxu0 0.0
        %602 = vmatpush1.msra.mxu0 0.0
        %603 = vmatprep.subr.mxu0 0.0
        %604 = vmatpush1.msra.mxu0 0.0
        %605 = vmatprep.subr.mxu0 0.0
        %606 = vmatpush1.msra.mxu0 0.0
        %607 = vmatprep.subr.mxu0 0.0
        %608 = vmatpush1.msra.mxu0 0.0
        %609 = vmatprep.subr.mxu0 0.0
        %610 = vmatpush1.msra.mxu0 0.0
        %611 = vmatprep.subr.mxu0 0.0
        %612 = vmatpush1.msra.mxu0 0.0
        %613 = vmatprep.subr.mxu0 0.0
        %614 = vmatpush1.msra.mxu0 0.0
        %615 = vmatprep.subr.mxu0 0.0
        %616 = vmatpush1.msra.mxu0 0.0
        %617 = vmatprep.subr.mxu0 0.0
        %618 = vmatpush1.msra.mxu0 0.0
        %619 = vmatprep.subr.mxu0 0.0
        %620 = vmatpush1.msra.mxu0 0.0
        %621 = vmatprep.subr.mxu0 0.0
        %622 = vmatpush1.msra.mxu0 0.0
        %623 = vmatprep.subr.mxu0 0.0
        %624 = vmatpush1.msra.mxu0 0.0
        %625 = vmatprep.subr.mxu0 0.0
        %626 = vmatpush1.msra.mxu0 0.0
        %627 = vmatprep.subr.mxu0 0.0
        %628 = vmatpush1.msra.mxu0 0.0
        %629 = vmatprep.subr.mxu0 0.0
        %630 = vmatpush1.msra.mxu0 0.0
        %631 = vmatprep.subr.mxu0 0.0
        %632 = vmatpush1.msra.mxu0 0.0
        %633 = vmatprep.subr.mxu0 0.0
        %634 = vmatpush1.msra.mxu0 0.0
        %635 = vmatprep.subr.mxu0 0.0
        %636 = vmatpush1.msra.mxu0 0.0
        %637 = vmatprep.subr.mxu0 0.0
        %638 = vmatpush1.msra.mxu0 0.0
        %639 = vmatprep.subr.mxu0 0.0
        %640 = vmatpush1.msra.mxu0 0.0
        %641 = vmatprep.subr.mxu0 0.0
        %642 = vmatpush1.msra.mxu0 0.0
        %643 = vmatprep.subr.mxu0 0.0
        %644 = vmatpush1.msra.mxu0 0.0
        %645 = vmatprep.subr.mxu0 0.0
        %646 = vmatpush1.msra.mxu0 0.0
        %647 = vmatprep.mubr.f32.mxu0 0.0
        %648 = vmatmul.mubr.f32.gmra.mrb[0].mxu0 %v581
        %v649 = vpop.f32.mrb[0].mxu0
        %v650 = vadd.f32 %v577, %v649
        %v651 = vpop.f32.mrb[0].mxu0
        %652 = vdwg.mxu0
        %v653 = vmul.f32 %v650, 0.17677669
        %v654 = vld [vmem:[#allocation2] sm:$0xff]
        %v656 = vsel %vm579, %v653, 0
        %v659 = vsel %vm579, %v654, 0
        %661 = vmatprep.subr.mxu0 0.0
        %662 = vmatpush1.xpose.msra.mxu0 %v659
        %663 = vmatprep.subr.mxu0 0.0
        %664 = vmatpush1.xpose.msra.mxu0 0.0
        %665 = vmatprep.subr.mxu0 0.0
        %666 = vmatpush1.xpose.msra.mxu0 0.0
        %667 = vmatprep.subr.mxu0 0.0
        %668 = vmatpush1.xpose.msra.mxu0 0.0
        %669 = vmatprep.subr.mxu0 0.0
        %670 = vmatpush1.xpose.msra.mxu0 0.0
        %671 = vmatprep.subr.mxu0 0.0
        %672 = vmatpush1.xpose.msra.mxu0 0.0
        %673 = vmatprep.subr.mxu0 0.0
        %674 = vmatpush1.xpose.msra.mxu0 0.0
        %675 = vmatprep.subr.mxu0 0.0
        %676 = vmatpush1.xpose.msra.mxu0 0.0
        %677 = vmatprep.subr.mxu0 0.0
        %678 = vmatpush1.xpose.msra.mxu0 0.0
        %679 = vmatprep.subr.mxu0 0.0
        %680 = vmatpush1.xpose.msra.mxu0 0.0
        %681 = vmatprep.subr.mxu0 0.0
        %682 = vmatpush1.xpose.msra.mxu0 0.0
        %683 = vmatprep.subr.mxu0 0.0
        %684 = vmatpush1.xpose.msra.mxu0 0.0
        %685 = vmatprep.subr.mxu0 0.0
        %686 = vmatpush1.xpose.msra.mxu0 0.0
        %687 = vmatprep.subr.mxu0 0.0
        %688 = vmatpush1.xpose.msra.mxu0 0.0
        %689 = vmatprep.subr.mxu0 0.0
        %690 = vmatpush1.xpose.msra.mxu0 0.0
        %691 = vmatprep.subr.mxu0 0.0
        %692 = vmatpush1.xpose.msra.mxu0 0.0
        %693 = vmatprep.subr.mxu0 0.0
        %694 = vmatpush1.xpose.msra.mxu0 0.0
        %695 = vmatprep.subr.mxu0 0.0
        %696 = vmatpush1.xpose.msra.mxu0 0.0
        %697 = vmatprep.subr.mxu0 0.0
        %698 = vmatpush1.xpose.msra.mxu0 0.0
        %699 = vmatprep.subr.mxu0 0.0
        %700 = vmatpush1.xpose.msra.mxu0 0.0
        %701 = vmatprep.subr.mxu0 0.0
        %702 = vmatpush1.xpose.msra.mxu0 0.0
        %703 = vmatprep.subr.mxu0 0.0
        %704 = vmatpush1.xpose.msra.mxu0 0.0
        %705 = vmatprep.subr.mxu0 0.0
        %706 = vmatpush1.xpose.msra.mxu0 0.0
        %707 = vmatprep.subr.mxu0 0.0
        %708 = vmatpush1.xpose.msra.mxu0 0.0
        %709 = vmatprep.subr.mxu0 0.0
        %710 = vmatpush1.xpose.msra.mxu0 0.0
        %711 = vmatprep.subr.mxu0 0.0
        %712 = vmatpush1.xpose.msra.mxu0 0.0
        %713 = vmatprep.subr.mxu0 0.0
        %714 = vmatpush1.xpose.msra.mxu0 0.0
        %715 = vmatprep.subr.mxu0 0.0
        %716 = vmatpush1.xpose.msra.mxu0 0.0
        %717 = vmatprep.subr.mxu0 0.0
        %718 = vmatpush1.xpose.msra.mxu0 0.0
        %719 = vmatprep.subr.mxu0 0.0
        %720 = vmatpush1.xpose.msra.mxu0 0.0
        %721 = vmatprep.subr.mxu0 0.0
        %722 = vmatpush1.xpose.msra.mxu0 0.0
        %723 = vmatprep.subr.mxu0 0.0
        %724 = vmatpush1.xpose.msra.mxu0 0.0
        %725 = vmatprep.mubr.f32.mxu0 0.0
        %726 = vmatmul.mubr.f32.gmra.mrb[0].mxu0 %v656
        %v727 = vpop.f32.mrb[0].mxu0
        %v728 = vadd.f32 0.0, %v727
        %v729 = vpop.f32.mrb[0].mxu0
        %730 = vdwg.mxu0
        %vm731 = vcmask 64512
        %v732 = vsel %vm731, %v728, -inf
        %733 = vmax.xlane.f32.xlu0 %v732
        %v734 = vpop.xlane.xlu0 %733
        %v735 = vsub.f32 %v728, %v734
        %v736 = vmul.f32 %v735, 1.442695
        %v737 = vpow.pop %v736
        %v738 = vsel %vm731, %v737, 0.0
        %739 = vadd.xlane.f32.xlu0 %v738
        %v740 = vpop.xlane.xlu0 %739
        %v741 = vrcp.pop %v740
        %v742 = vmul.f32 %v737, %v741
        %v743 = vld [vmem:[#allocation3] sm:$0xff]
        %v745 = vsel %vm731, %v742, 0
        %747 = vmatprep.subr.mxu0 0.0
        %748 = vmatpush1.msra.mxu0 %v743
        %749 = vmatprep.subr.mxu0 0.0
        %750 = vmatpush1.msra.mxu0 0.0
        %751 = vmatprep.subr.mxu0 0.0
        %752 = vmatpush1.msra.mxu0 0.0
        %753 = vmatprep.subr.mxu0 0.0
        %754 = vmatpush1.msra.mxu0 0.0
        %755 = vmatprep.subr.mxu0 0.0
        %756 = vmatpush1.msra.mxu0 0.0
        %757 = vmatprep.subr.mxu0 0.0
        %758 = vmatpush1.msra.mxu0 0.0
        %759 = vmatprep.subr.mxu0 0.0
        %760 = vmatpush1.msra.mxu0 0.0
        %761 = vmatprep.subr.mxu0 0.0
        %762 = vmatpush1.msra.mxu0 0.0
        %763 = vmatprep.subr.mxu0 0.0
        %764 = vmatpush1.msra.mxu0 0.0
        %765 = vmatprep.subr.mxu0 0.0
        %766 = vmatpush1.msra.mxu0 0.0
        %767 = vmatprep.subr.mxu0 0.0
        %768 = vmatpush1.msra.mxu0 0.0
        %769 = vmatprep.subr.mxu0 0.0
        %770 = vmatpush1.msra.mxu0 0.0
        %771 = vmatprep.subr.mxu0 0.0
        %772 = vmatpush1.msra.mxu0 0.0
        %773 = vmatprep.subr.mxu0 0.0
        %774 = vmatpush1.msra.mxu0 0.0
        %775 = vmatprep.subr.mxu0 0.0
        %776 = vmatpush1.msra.mxu0 0.0
        %777 = vmatprep.subr.mxu0 0.0
        %778 = vmatpush1.msra.mxu0 0.0
        %779 = vmatprep.subr.mxu0 0.0
        %780 = vmatpush1.msra.mxu0 0.0
        %781 = vmatprep.subr.mxu0 0.0
        %782 = vmatpush1.msra.mxu0 0.0
        %783 = vmatprep.subr.mxu0 0.0
        %784 = vmatpush1.msra.mxu0 0.0
        %785 = vmatprep.subr.mxu0 0.0
        %786 = vmatpush1.msra.mxu0 0.0
        %787 = vmatprep.subr.mxu0 0.0
        %788 = vmatpush1.msra.mxu0 0.0
        %789 = vmatprep.subr.mxu0 0.0
        %790 = vmatpush1.msra.mxu0 0.0
        %791 = vmatprep.subr.mxu0 0.0
        %792 = vmatpush1.msra.mxu0 0.0
        %793 = vmatprep.subr.mxu0 0.0
        %794 = vmatpush1.msra.mxu0 0.0
        %795 = vmatprep.subr.mxu0 0.0
        %796 = vmatpush1.msra.mxu0 0.0
        %797 = vmatprep.subr.mxu0 0.0
        %798 = vmatpush1.msra.mxu0 0.0
        %799 = vmatprep.subr.mxu0 0.0
        %800 = vmatpush1.msra.mxu0 0.0
        %801 = vmatprep.subr.mxu0 0.0
        %802 = vmatpush1.msra.mxu0 0.0
        %803 = vmatprep.subr.mxu0 0.0
        %804 = vmatpush1.msra.mxu0 0.0
        %805 = vmatprep.subr.mxu0 0.0
        %806 = vmatpush1.msra.mxu0 0.0
        %807 = vmatprep.subr.mxu0 0.0
        %808 = vmatpush1.msra.mxu0 0.0
        %809 = vmatprep.subr.mxu0 0.0
        %810 = vmatpush1.msra.mxu0 0.0
        %811 = vmatprep.mubr.f32.mxu0 0.0
        %812 = vmatmul.mubr.f32.gmra.mrb[0].mxu0 %v745
        %v813 = vpop.f32.mrb[0].mxu0
        %v814 = vadd.f32 0.0, %v813
        %v815 = vpop.f32.mrb[0].mxu0
        %816 = vdwg.mxu0
        %817 = vst.msk [vmem:[%s384] sm:$0xff] %vm579, %v814
        %818 = vst.msk [vmem:[%s391] sm:$0xff] %vm731, %v742
        %s819 = sand.u32 %s205, 1
        %s820 = scalar_lea.sflag [#allocation6], %s819
        %s821 = sand.u32 %s205, 1
        %s822 = smul.addr %s821, 8
        %s823 = scalar_lea.vmem [#allocation12], %s822
        %s824 = sand.u32 %s233, 1
        %s825 = scalar_lea.sflag [#allocation14], %s824
        %s826 = sand.u32 %s233, 1
        %s827 = smul.addr %s826, 8
        %s828 = scalar_lea.vmem [#allocation13], %s827
        // Predicated region
        $region69: #{tpu_custom_call.1} parent=47 // pred_check
          %p829 = pneg %p215
        $region70: #{tpu_custom_call.1} parent=47 // pred_check_branch
          %831 = sbr.rel (%p829) target = $region72
        $region71: #{tpu_custom_call.1} parent=47 // pred_region
          %s833 = ssub.s32 128, 128
          %834 = vsyncadd %s820, %s833
          %s835 = sadd.s32 %s36, %s35
          %s836 = smul.addr %s835, 128
          %s837 = scalar_lea.hbm %s7, %s836
          %s839 = sshll.u32 %s823, 4
          %s840 = int_to_ptr.vmem [resolvable:$true] %s839
          %842 = dma.vmem_to_hbm [thread:$0]  %s840, 128, %s837, %s820
        $region72: #{tpu_custom_call.1} parent=47 // pred_fallthru
          _
        // Predicated region
        $region73: #{tpu_custom_call.1} parent=47 // pred_check
          %p843 = pneg %p243
        $region74: #{tpu_custom_call.1} parent=47 // pred_check_branch
          %845 = sbr.rel (%p843) target = $region76
        $region75: #{tpu_custom_call.1} parent=47 // pred_region
          %s847 = ssub.s32 128, 128
          %848 = vsyncadd %s825, %s847
          %s849 = sadd.s32 %s36, %s35
          %s850 = smul.addr %s849, 128
          %s851 = scalar_lea.hbm %s8, %s850
          %s853 = sshll.u32 %s828, 4
          %s854 = int_to_ptr.vmem [resolvable:$true] %s853
          %856 = dma.vmem_to_hbm [thread:$0]  %s854, 128, %s851, %s825
        $region76: #{tpu_custom_call.1} parent=47 // pred_fallthru
          _
      $region48: #{tpu_custom_call.1} parent=5 // pred_fallthru
        _
      %p857 = scmp.le.s32.totalorder 2, %s26
      // Predicated region
      $region77: #{tpu_custom_call.1} parent=5 // pred_check
        %p858 = pneg %p857
      $region78: #{tpu_custom_call.1} parent=5 // pred_check_branch
        %860 = sbr.rel (%p858) target = $region80
      $region79: #{tpu_custom_call.1} parent=5 // pred_region
        %s861 = ssub.s32 %s26, 2
        // Predicated region
        $region81: #{tpu_custom_call.1} parent=79 // pred_check
          %p862 = pneg %p221
        $region82: #{tpu_custom_call.1} parent=79 // pred_check_branch
          %864 = sbr.rel (%p862) target = $region84
        $region83: #{tpu_custom_call.1} parent=79 // pred_region
          %s865 = sand.u32 %s206, 1
          %s866 = scalar_lea.sflag [#allocation6], %s865
          %s867 = sand.u32 %s206, 1
          %s868 = smul.addr %s867, 8
          %s869 = scalar_lea.vmem [#allocation12], %s868
          %870 = dma.done %s866, 128
        $region84: #{tpu_custom_call.1} parent=79 // pred_fallthru
          _
        // Predicated region
        $region85: #{tpu_custom_call.1} parent=79 // pred_check
          %p871 = pneg %p249
        $region86: #{tpu_custom_call.1} parent=79 // pred_check_branch
          %873 = sbr.rel (%p871) target = $region88
        $region87: #{tpu_custom_call.1} parent=79 // pred_region
          %s874 = sand.u32 %s234, 1
          %s875 = scalar_lea.sflag [#allocation14], %s874
          %s876 = sand.u32 %s234, 1
          %s877 = smul.addr %s876, 8
          %s878 = scalar_lea.vmem [#allocation13], %s877
          %879 = dma.done %s875, 128
        $region88: #{tpu_custom_call.1} parent=79 // pred_fallthru
          _
      $region80: #{tpu_custom_call.1} parent=5 // pred_fallthru
        _
    $region6: #{tpu_custom_call.1} parent=1 // loop_footer
      %s30 = sadd.s32 1, %s26
    $region7: #{tpu_custom_call.1} parent=1 // loop_footer_branch
      %25 = sbr.rel target = $region3
    $region8: #{tpu_custom_call.1} parent=1 // loop_exit
      _
    %880 = vsyncpa [#allocation5], 1
    %s881 = scalar_lea.sflag [#allocation5], 1
    %882 = vsyncpa %s881, 1
    %883 = vsyncpa [#allocation8], 1
    %884 = vsyncpa [#allocation11], 1
    %885 = vsyncpa [#allocation6], 1
    %s886 = scalar_lea.sflag [#allocation6], 1
    %887 = vsyncpa %s886, 1
    %888 = vsyncpa [#allocation14], 1
    %s889 = scalar_lea.sflag [#allocation14], 1
    %890 = vsyncpa %s889, 1

</llo_original>
